<compile_context>
chip_gen: v5e
topology: v5e:2x2
jax: 0.10.0
libtpu: 0.0.40
codegen_flags: <defaults>
</compile_context>

<pallas_src>
import functools

import jax
import jax.numpy as jnp
from jax.experimental import pallas as pl
from jax.experimental.pallas import tpu as pltpu

# loss_composer weights (TransT defaults)
W_CE = 8.334
W_L1 = 5.0
W_GIOU = 2.0
EPS = 1e-7


def _criterion_kernel(logits_ref, labels_ref, pb_ref, tb_ref, out_ref,
                      ce_acc, pos_acc, box_acc, *, inv_bn):
    step = pl.program_id(0)

    @pl.when(step == 0)
    def _init():
        ce_acc[...] = jnp.zeros_like(ce_acc)
        pos_acc[...] = jnp.zeros_like(pos_acc)
        box_acc[...] = jnp.zeros_like(box_acc)

    logits = logits_ref[...]          # (B, 2, T) f32
    labels = labels_ref[...]          # (B, T)    f32, 1.0 == positive query
    pb = pb_ref[...]                  # (B, 4, T) f32, pred   cxcywh
    tb = tb_ref[...]                  # (B, 4, T) f32, target cxcywh

    # ---------------- classification: binary-logit cross entropy ---------------
    # labels*softplus(-d) + (1-labels)*softplus(d) == softplus(d) - labels*d
    d = logits[:, 1, :] - logits[:, 0, :]                        # (B, T)
    softplus_d = jnp.maximum(d, 0.0) + jnp.log(1.0 + jnp.exp(-jnp.abs(d)))
    ce = softplus_d - labels * d                                 # (B, T)

    # ---------------- unpack boxes once (reuse widths/heights) -----------------
    pcx, pcy, pw, ph = pb[:, 0, :], pb[:, 1, :], pb[:, 2, :], pb[:, 3, :]
    tcx, tcy, tw, th = tb[:, 0, :], tb[:, 1, :], tb[:, 2, :], tb[:, 3, :]

    # ---------------- bbox L1 (explicit 4-term VPU sum, no axis reduce) --------
    l1 = (jnp.abs(pcx - tcx) + jnp.abs(pcy - tcy)
          + jnp.abs(pw - tw) + jnp.abs(ph - th))                 # (B, T)

    # ---------------- bbox GIoU (cxcywh -> xyxy) --------------------------------
    hpw, hph = 0.5 * pw, 0.5 * ph
    htw, hth = 0.5 * tw, 0.5 * th
    px1, px2 = pcx - hpw, pcx + hpw
    py1, py2 = pcy - hph, pcy + hph
    tx1, tx2 = tcx - htw, tcx + htw
    ty1, ty2 = tcy - hth, tcy + hth

    iw = jnp.minimum(px2, tx2) - jnp.maximum(px1, tx1)
    ih = jnp.minimum(py2, ty2) - jnp.maximum(py1, ty1)
    inter = jnp.maximum(iw, 0.0) * jnp.maximum(ih, 0.0)

    union = pw * ph + tw * th - inter         # no clamp: standard DETR/TransT GIoU
    iou = inter * pl.reciprocal(union + EPS, approx=True)

    cw = jnp.maximum(px2, tx2) - jnp.minimum(px1, tx1)
    ch = jnp.maximum(py2, ty2) - jnp.minimum(py1, ty1)
    carea = cw * ch
    giou = iou - (carea - union) * pl.reciprocal(carea + EPS, approx=True)

    bbox_term = labels * (W_L1 * l1 + W_GIOU * (1.0 - giou))     # (B, T)

    # ---------------- per-tile partial accumulation (VPU-only) -----------------
    ce_acc[...] = ce_acc[...] + ce
    pos_acc[...] = pos_acc[...] + labels
    box_acc[...] = box_acc[...] + bbox_term

    # ---------------- loss_composer: weighted sum (finalize on last tile) ------
    @pl.when(step == pl.num_programs(0) - 1)
    def _finalize():
        num_pos = jnp.maximum(jnp.sum(pos_acc[...]), 1.0)
        out_ref[0] = ((W_CE * inv_bn) * jnp.sum(ce_acc[...])
                      + jnp.sum(box_acc[...]) / num_pos)


def _pick_tile(n):
    # Single block for small N; otherwise a lane-dense 128-multiple tile so
    # BlockSpec can double-buffer HBM->VMEM against compute.
    if n <= 1024:
        return n
    for cand in (2048, 1024, 512, 256, 128):
        if n % cand == 0:
            return cand
    return n


def single_scale_criterion(logits, labels, pred_boxes, target_boxes):
    B, C, N = logits.shape
    assert C == 2
    assert labels.shape == (B, N)
    assert pred_boxes.shape == (B, 4, N) and target_boxes.shape == (B, 4, N)

    tile = _pick_tile(N)
    assert N % tile == 0
    grid = (N // tile,)
    inv_bn = 1.0 / float(B * N)

    kernel = functools.partial(_criterion_kernel, inv_bn=inv_bn)

    cost = pl.CostEstimate(
        flops=60 * B * N,
        transcendentals=4 * B * N,
        bytes_accessed=(2 + 1 + 4 + 4) * 4 * B * N + 4,
    )

    # TODO(synk): on v7x, shard the query-tile axis across the 2 TensorCores
    # ("parallel" semantics + per-core partial outputs combined in the wrapper).
    return pl.pallas_call(
        kernel,
        out_shape=jax.ShapeDtypeStruct((1,), jnp.float32),
        grid_spec=pltpu.PrefetchScalarGridSpec(
            num_scalar_prefetch=0,
            grid=grid,
            in_specs=[
                pl.BlockSpec((B, 2, tile), lambda i: (0, 0, i)),
                pl.BlockSpec((B, tile), lambda i: (0, i)),
                pl.BlockSpec((B, 4, tile), lambda i: (0, 0, i)),
                pl.BlockSpec((B, 4, tile), lambda i: (0, 0, i)),
            ],
            out_specs=pl.BlockSpec((1,), lambda i: (0,),
                                   memory_space=pltpu.MemorySpace.SMEM),
            scratch_shapes=[
                pltpu.VMEM((B, tile), jnp.float32),   # ce partial
                pltpu.VMEM((B, tile), jnp.float32),   # num_pos partial
                pltpu.VMEM((B, tile), jnp.float32),   # weighted bbox partial
            ],
        ),
        compiler_params=pltpu.CompilerParams(
            dimension_semantics=("arbitrary",),
        ),
        cost_estimate=cost,
    )(logits.astype(jnp.float32), labels.astype(jnp.float32),
      pred_boxes.astype(jnp.float32), target_boxes.astype(jnp.float32))


def _reference(logits, labels, pb, tb):
    # pure-JAX reference for correctness check
    logp = jax.nn.log_softmax(logits, axis=1)
    ce = -(labels * logp[:, 1, :] + (1.0 - labels) * logp[:, 0, :])
    loss_ce = jnp.mean(ce)
    num_pos = jnp.maximum(jnp.sum(labels), 1.0)
    loss_l1 = jnp.sum(jnp.sum(jnp.abs(pb - tb), axis=1) * labels) / num_pos

    def xyxy(b):
        return (b[:, 0] - 0.5 * b[:, 2], b[:, 1] - 0.5 * b[:, 3],
                b[:, 0] + 0.5 * b[:, 2], b[:, 1] + 0.5 * b[:, 3])

    px1, py1, px2, py2 = xyxy(pb)
    tx1, ty1, tx2, ty2 = xyxy(tb)
    inter = (jnp.maximum(jnp.minimum(px2, tx2) - jnp.maximum(px1, tx1), 0.0) *
             jnp.maximum(jnp.minimum(py2, ty2) - jnp.maximum(py1, ty1), 0.0))
    union = ((px2 - px1) * (py2 - py1) + (tx2 - tx1) * (ty2 - ty1) - inter)
    iou = inter / (union + EPS)
    carea = ((jnp.maximum(px2, tx2) - jnp.minimum(px1, tx1)) *
             (jnp.maximum(py2, ty2) - jnp.minimum(py1, ty1)))
    giou = iou - (carea - union) / (carea + EPS)
    loss_giou = jnp.sum((1.0 - giou) * labels) / num_pos
    return W_CE * loss_ce + W_L1 * loss_l1 + W_GIOU * loss_giou


def _run_case(key, B, N):
    k1, k2, k3, k4 = jax.random.split(key, 4)
    logits = jax.random.normal(k1, (B, 2, N), dtype=jnp.float32)
    labels = (jax.random.uniform(k2, (B, N)) < 0.15).astype(jnp.float32)
    pred_boxes = jax.nn.sigmoid(jax.random.normal(k3, (B, 4, N), dtype=jnp.float32))
    target_boxes = jax.nn.sigmoid(jax.random.normal(k4, (B, 4, N), dtype=jnp.float32))

    out = single_scale_criterion(logits, labels, pred_boxes, target_boxes)
    jax.block_until_ready(out)
    ref = _reference(logits, labels, pred_boxes, target_boxes)
    # tolerance loosened because iou/giou denominators use EUP approx reciprocal
    assert jnp.allclose(out[0], ref, rtol=5e-3, atol=5e-3), (out, ref)


if __name__ == "__main__":
    key = jax.random.PRNGKey(0)
    k_small, k_tiled = jax.random.split(key)

    # small single-tile case (grid=(1,))
    _run_case(k_small, B=2, N=128)
    # multi-tile case exercising the accumulate/finalize path (tile=512, grid=5)
    _run_case(k_tiled, B=2, N=2560)

    print("KERNEL_OK")
</pallas_src>

<mosaic_0001>
module attributes {stable_mosaic.version = 11 : i64} {
  func.func @_criterion_kernel(%arg0: i32, %arg1: memref<2x2x128xf32, #tpu.memory_space<vmem>>, %arg2: memref<2x128xf32, #tpu.memory_space<vmem>>, %arg3: memref<2x4x128xf32, #tpu.memory_space<vmem>>, %arg4: memref<2x4x128xf32, #tpu.memory_space<vmem>>, %arg5: memref<1xf32, #tpu.memory_space<smem>>, %arg6: memref<2x128xf32, #tpu.memory_space<vmem>>, %arg7: memref<2x128xf32, #tpu.memory_space<vmem>>, %arg8: memref<2x128xf32, #tpu.memory_space<vmem>>) attributes {dimension_semantics = [#tpu.dimension_semantics<arbitrary>], iteration_bounds = array<i64: 1>, scalar_prefetch = 0 : i64, scratch_operands = 3 : i64, tpu.core_type = #tpu.core_type<tc>, window_params = [{transform_indices = @transform_0, window_bounds = array<i64: 2, 2, 128>}, {transform_indices = @transform_1, window_bounds = array<i64: 2, 128>}, {transform_indices = @transform_2, window_bounds = array<i64: 2, 4, 128>}, {transform_indices = @transform_3, window_bounds = array<i64: 2, 4, 128>}, {transform_indices = @transform_4, window_bounds = array<i64: 1>}]} {
    %c0_i32 = arith.constant 0 : i32
    %0 = arith.cmpi eq, %arg0, %c0_i32 : i32
    %1 = arith.extui %0 : i1 to i32
    %c0_i32_0 = arith.constant 0 : i32
    %2 = arith.cmpi ne, %1, %c0_i32_0 : i32
    scf.if %2 {
      %cst_38 = arith.constant 0.000000e+00 : f32
      %119 = vector.broadcast %cst_38 : f32 to vector<2x128xf32>
      %c0_39 = arith.constant 0 : index
      %c0_40 = arith.constant 0 : index
      %120 = vector.load %arg6[%c0_39, %c0_40] : memref<2x128xf32, #tpu.memory_space<vmem>>, vector<2x128xf32>
      tpu.vector_store %arg6[%c0_39, %c0_40], %119 {strides = array<i32>} : memref<2x128xf32, #tpu.memory_space<vmem>>, vector<2x128xf32>,
      %cst_41 = arith.constant 0.000000e+00 : f32
      %121 = vector.broadcast %cst_41 : f32 to vector<2x128xf32>
      %c0_42 = arith.constant 0 : index
      %c0_43 = arith.constant 0 : index
      %122 = vector.load %arg7[%c0_42, %c0_43] : memref<2x128xf32, #tpu.memory_space<vmem>>, vector<2x128xf32>
      tpu.vector_store %arg7[%c0_42, %c0_43], %121 {strides = array<i32>} : memref<2x128xf32, #tpu.memory_space<vmem>>, vector<2x128xf32>,
      %cst_44 = arith.constant 0.000000e+00 : f32
      %123 = vector.broadcast %cst_44 : f32 to vector<2x128xf32>
      %c0_45 = arith.constant 0 : index
      %c0_46 = arith.constant 0 : index
      %124 = vector.load %arg8[%c0_45, %c0_46] : memref<2x128xf32, #tpu.memory_space<vmem>>, vector<2x128xf32>
      tpu.vector_store %arg8[%c0_45, %c0_46], %123 {strides = array<i32>} : memref<2x128xf32, #tpu.memory_space<vmem>>, vector<2x128xf32>,
    } else {
    }
    %c0 = arith.constant 0 : index
    %c0_1 = arith.constant 0 : index
    %c0_2 = arith.constant 0 : index
    %3 = vector.load %arg1[%c0, %c0_1, %c0_2] : memref<2x2x128xf32, #tpu.memory_space<vmem>>, vector<2x2x128xf32>
    %c0_3 = arith.constant 0 : index
    %c0_4 = arith.constant 0 : index
    %4 = vector.load %arg2[%c0_3, %c0_4] : memref<2x128xf32, #tpu.memory_space<vmem>>, vector<2x128xf32>
    %c0_5 = arith.constant 0 : index
    %c0_6 = arith.constant 0 : index
    %c0_7 = arith.constant 0 : index
    %5 = vector.load %arg3[%c0_5, %c0_6, %c0_7] : memref<2x4x128xf32, #tpu.memory_space<vmem>>, vector<2x4x128xf32>
    %c0_8 = arith.constant 0 : index
    %c0_9 = arith.constant 0 : index
    %c0_10 = arith.constant 0 : index
    %6 = vector.load %arg4[%c0_8, %c0_9, %c0_10] : memref<2x4x128xf32, #tpu.memory_space<vmem>>, vector<2x4x128xf32>
    %7 = vector.extract_strided_slice %3 {offsets = [0, 1, 0], sizes = [2, 1, 128], strides = [1, 1, 1]} : vector<2x2x128xf32> to vector<2x1x128xf32>
    %8 = vector.shape_cast %7 : vector<2x1x128xf32> to vector<2x128xf32>
    %9 = vector.extract_strided_slice %3 {offsets = [0, 0, 0], sizes = [2, 1, 128], strides = [1, 1, 1]} : vector<2x2x128xf32> to vector<2x1x128xf32>
    %10 = vector.shape_cast %9 : vector<2x1x128xf32> to vector<2x128xf32>
    %11 = arith.subf %8, %10 : vector<2x128xf32>
    %cst = arith.constant 0.000000e+00 : f32
    %12 = vector.broadcast %cst : f32 to vector<2x128xf32>
    %13 = arith.maximumf %11, %12 : vector<2x128xf32>
    %14 = math.absf %11 : vector<2x128xf32>
    %cst_11 = arith.constant 0.000000e+00 : f32
    %15 = vector.broadcast %cst_11 : f32 to vector<2x128xf32>
    %16 = arith.subf %15, %14 : vector<2x128xf32>
    %17 = math.exp %16 : vector<2x128xf32>
    %cst_12 = arith.constant 1.000000e+00 : f32
    %18 = vector.broadcast %cst_12 : f32 to vector<2x128xf32>
    %19 = arith.addf %18, %17 : vector<2x128xf32>
    %20 = math.log %19 : vector<2x128xf32>
    %21 = arith.addf %13, %20 : vector<2x128xf32>
    %22 = arith.mulf %4, %11 : vector<2x128xf32>
    %23 = arith.subf %21, %22 : vector<2x128xf32>
    %24 = vector.extract_strided_slice %5 {offsets = [0, 0, 0], sizes = [2, 1, 128], strides = [1, 1, 1]} : vector<2x4x128xf32> to vector<2x1x128xf32>
    %25 = vector.shape_cast %24 : vector<2x1x128xf32> to vector<2x128xf32>
    %26 = vector.extract_strided_slice %5 {offsets = [0, 1, 0], sizes = [2, 1, 128], strides = [1, 1, 1]} : vector<2x4x128xf32> to vector<2x1x128xf32>
    %27 = vector.shape_cast %26 : vector<2x1x128xf32> to vector<2x128xf32>
    %28 = vector.extract_strided_slice %5 {offsets = [0, 2, 0], sizes = [2, 1, 128], strides = [1, 1, 1]} : vector<2x4x128xf32> to vector<2x1x128xf32>
    %29 = vector.shape_cast %28 : vector<2x1x128xf32> to vector<2x128xf32>
    %30 = vector.extract_strided_slice %5 {offsets = [0, 3, 0], sizes = [2, 1, 128], strides = [1, 1, 1]} : vector<2x4x128xf32> to vector<2x1x128xf32>
    %31 = vector.shape_cast %30 : vector<2x1x128xf32> to vector<2x128xf32>
    %32 = vector.extract_strided_slice %6 {offsets = [0, 0, 0], sizes = [2, 1, 128], strides = [1, 1, 1]} : vector<2x4x128xf32> to vector<2x1x128xf32>
    %33 = vector.shape_cast %32 : vector<2x1x128xf32> to vector<2x128xf32>
    %34 = vector.extract_strided_slice %6 {offsets = [0, 1, 0], sizes = [2, 1, 128], strides = [1, 1, 1]} : vector<2x4x128xf32> to vector<2x1x128xf32>
    %35 = vector.shape_cast %34 : vector<2x1x128xf32> to vector<2x128xf32>
    %36 = vector.extract_strided_slice %6 {offsets = [0, 2, 0], sizes = [2, 1, 128], strides = [1, 1, 1]} : vector<2x4x128xf32> to vector<2x1x128xf32>
    %37 = vector.shape_cast %36 : vector<2x1x128xf32> to vector<2x128xf32>
    %38 = vector.extract_strided_slice %6 {offsets = [0, 3, 0], sizes = [2, 1, 128], strides = [1, 1, 1]} : vector<2x4x128xf32> to vector<2x1x128xf32>
    %39 = vector.shape_cast %38 : vector<2x1x128xf32> to vector<2x128xf32>
    %40 = arith.subf %25, %33 : vector<2x128xf32>
    %41 = math.absf %40 : vector<2x128xf32>
    %42 = arith.subf %27, %35 : vector<2x128xf32>
    %43 = math.absf %42 : vector<2x128xf32>
    %44 = arith.addf %41, %43 : vector<2x128xf32>
    %45 = arith.subf %29, %37 : vector<2x128xf32>
    %46 = math.absf %45 : vector<2x128xf32>
    %47 = arith.addf %44, %46 : vector<2x128xf32>
    %48 = arith.subf %31, %39 : vector<2x128xf32>
    %49 = math.absf %48 : vector<2x128xf32>
    %50 = arith.addf %47, %49 : vector<2x128xf32>
    %cst_13 = arith.constant 5.000000e-01 : f32
    %51 = vector.broadcast %cst_13 : f32 to vector<2x128xf32>
    %52 = arith.mulf %51, %29 : vector<2x128xf32>
    %cst_14 = arith.constant 5.000000e-01 : f32
    %53 = vector.broadcast %cst_14 : f32 to vector<2x128xf32>
    %54 = arith.mulf %53, %31 : vector<2x128xf32>
    %cst_15 = arith.constant 5.000000e-01 : f32
    %55 = vector.broadcast %cst_15 : f32 to vector<2x128xf32>
    %56 = arith.mulf %55, %37 : vector<2x128xf32>
    %cst_16 = arith.constant 5.000000e-01 : f32
    %57 = vector.broadcast %cst_16 : f32 to vector<2x128xf32>
    %58 = arith.mulf %57, %39 : vector<2x128xf32>
    %59 = arith.subf %25, %52 : vector<2x128xf32>
    %60 = arith.addf %25, %52 : vector<2x128xf32>
    %61 = arith.subf %27, %54 : vector<2x128xf32>
    %62 = arith.addf %27, %54 : vector<2x128xf32>
    %63 = arith.subf %33, %56 : vector<2x128xf32>
    %64 = arith.addf %33, %56 : vector<2x128xf32>
    %65 = arith.subf %35, %58 : vector<2x128xf32>
    %66 = arith.addf %35, %58 : vector<2x128xf32>
    %67 = arith.minimumf %60, %64 : vector<2x128xf32>
    %68 = arith.maximumf %59, %63 : vector<2x128xf32>
    %69 = arith.subf %67, %68 : vector<2x128xf32>
    %70 = arith.minimumf %62, %66 : vector<2x128xf32>
    %71 = arith.maximumf %61, %65 : vector<2x128xf32>
    %72 = arith.subf %70, %71 : vector<2x128xf32>
    %cst_17 = arith.constant 0.000000e+00 : f32
    %73 = vector.broadcast %cst_17 : f32 to vector<2x128xf32>
    %74 = arith.maximumf %69, %73 : vector<2x128xf32>
    %cst_18 = arith.constant 0.000000e+00 : f32
    %75 = vector.broadcast %cst_18 : f32 to vector<2x128xf32>
    %76 = arith.maximumf %72, %75 : vector<2x128xf32>
    %77 = arith.mulf %74, %76 : vector<2x128xf32>
    %78 = arith.mulf %29, %31 : vector<2x128xf32>
    %79 = arith.mulf %37, %39 : vector<2x128xf32>
    %80 = arith.addf %78, %79 : vector<2x128xf32>
    %81 = arith.subf %80, %77 : vector<2x128xf32>
    %cst_19 = arith.constant 1.000000e-07 : f32
    %82 = vector.broadcast %cst_19 : f32 to vector<2x128xf32>
    %83 = arith.addf %81, %82 : vector<2x128xf32>
    %84 = tpu.reciprocal %83 {approx = true} : vector<2x128xf32> -> vector<2x128xf32>
    %85 = arith.mulf %77, %84 : vector<2x128xf32>
    %86 = arith.maximumf %60, %64 : vector<2x128xf32>
    %87 = arith.minimumf %59, %63 : vector<2x128xf32>
    %88 = arith.subf %86, %87 : vector<2x128xf32>
    %89 = arith.maximumf %62, %66 : vector<2x128xf32>
    %90 = arith.minimumf %61, %65 : vector<2x128xf32>
    %91 = arith.subf %89, %90 : vector<2x128xf32>
    %92 = arith.mulf %88, %91 : vector<2x128xf32>
    %93 = arith.subf %92, %81 : vector<2x128xf32>
    %cst_20 = arith.constant 1.000000e-07 : f32
    %94 = vector.broadcast %cst_20 : f32 to vector<2x128xf32>
    %95 = arith.addf %92, %94 : vector<2x128xf32>
    %96 = tpu.reciprocal %95 {approx = true} : vector<2x128xf32> -> vector<2x128xf32>
    %97 = arith.mulf %93, %96 : vector<2x128xf32>
    %98 = arith.subf %85, %97 : vector<2x128xf32>
    %cst_21 = arith.constant 5.000000e+00 : f32
    %99 = vector.broadcast %cst_21 : f32 to vector<2x128xf32>
    %100 = arith.mulf %99, %50 : vector<2x128xf32>
    %cst_22 = arith.constant 1.000000e+00 : f32
    %101 = vector.broadcast %cst_22 : f32 to vector<2x128xf32>
    %102 = arith.subf %101, %98 : vector<2x128xf32>
    %cst_23 = arith.constant 2.000000e+00 : f32
    %103 = vector.broadcast %cst_23 : f32 to vector<2x128xf32>
    %104 = arith.mulf %103, %102 : vector<2x128xf32>
    %105 = arith.addf %100, %104 : vector<2x128xf32>
    %106 = arith.mulf %4, %105 : vector<2x128xf32>
    %c0_24 = arith.constant 0 : index
    %c0_25 = arith.constant 0 : index
    %107 = vector.load %arg6[%c0_24, %c0_25] : memref<2x128xf32, #tpu.memory_space<vmem>>, vector<2x128xf32>
    %108 = arith.addf %107, %23 : vector<2x128xf32>
    %c0_26 = arith.constant 0 : index
    %c0_27 = arith.constant 0 : index
    %109 = vector.load %arg6[%c0_26, %c0_27] : memref<2x128xf32, #tpu.memory_space<vmem>>, vector<2x128xf32>
    tpu.vector_store %arg6[%c0_26, %c0_27], %108 {strides = array<i32>} : memref<2x128xf32, #tpu.memory_space<vmem>>, vector<2x128xf32>,
    %c0_28 = arith.constant 0 : index
    %c0_29 = arith.constant 0 : index
    %110 = vector.load %arg7[%c0_28, %c0_29] : memref<2x128xf32, #tpu.memory_space<vmem>>, vector<2x128xf32>
    %111 = arith.addf %110, %4 : vector<2x128xf32>
    %c0_30 = arith.constant 0 : index
    %c0_31 = arith.constant 0 : index
    %112 = vector.load %arg7[%c0_30, %c0_31] : memref<2x128xf32, #tpu.memory_space<vmem>>, vector<2x128xf32>
    tpu.vector_store %arg7[%c0_30, %c0_31], %111 {strides = array<i32>} : memref<2x128xf32, #tpu.memory_space<vmem>>, vector<2x128xf32>,
    %c0_32 = arith.constant 0 : index
    %c0_33 = arith.constant 0 : index
    %113 = vector.load %arg8[%c0_32, %c0_33] : memref<2x128xf32, #tpu.memory_space<vmem>>, vector<2x128xf32>
    %114 = arith.addf %113, %106 : vector<2x128xf32>
    %c0_34 = arith.constant 0 : index
    %c0_35 = arith.constant 0 : index
    %115 = vector.load %arg8[%c0_34, %c0_35] : memref<2x128xf32, #tpu.memory_space<vmem>>, vector<2x128xf32>
    tpu.vector_store %arg8[%c0_34, %c0_35], %114 {strides = array<i32>} : memref<2x128xf32, #tpu.memory_space<vmem>>, vector<2x128xf32>,
    %c0_i32_36 = arith.constant 0 : i32
    %116 = arith.cmpi eq, %arg0, %c0_i32_36 : i32
    %117 = arith.extui %116 : i1 to i32
    %c0_i32_37 = arith.constant 0 : i32
    %118 = arith.cmpi ne, %117, %c0_i32_37 : i32
    scf.if %118 {
      %c0_38 = arith.constant 0 : index
      %c0_39 = arith.constant 0 : index
      %119 = vector.load %arg7[%c0_38, %c0_39] : memref<2x128xf32, #tpu.memory_space<vmem>>, vector<2x128xf32>
      %120 = vector.shape_cast %119 : vector<2x128xf32> to vector<1x2x128xf32>
      %cst_40 = arith.constant dense<0.000000e+00> : vector<1xf32>
      %121 = vector.multi_reduction <add>, %120, %cst_40 [1, 2] : vector<1x2x128xf32> to vector<1xf32>
      %122 = vector.shape_cast %121 : vector<1xf32> to vector<1x1x1xf32>
      %123 = vector.extract %122[0, 0, 0] : f32 from vector<1x1x1xf32>
      %cst_41 = arith.constant 1.000000e+00 : f32
      %124 = arith.maximumf %123, %cst_41 : f32
      %c0_42 = arith.constant 0 : index
      %c0_43 = arith.constant 0 : index
      %125 = vector.load %arg6[%c0_42, %c0_43] : memref<2x128xf32, #tpu.memory_space<vmem>>, vector<2x128xf32>
      %126 = vector.shape_cast %125 : vector<2x128xf32> to vector<1x2x128xf32>
      %cst_44 = arith.constant dense<0.000000e+00> : vector<1xf32>
      %127 = vector.multi_reduction <add>, %126, %cst_44 [1, 2] : vector<1x2x128xf32> to vector<1xf32>
      %128 = vector.shape_cast %127 : vector<1xf32> to vector<1x1x1xf32>
      %129 = vector.extract %128[0, 0, 0] : f32 from vector<1x1x1xf32>
      %cst_45 = arith.constant 0.0325546861 : f32
      %130 = arith.mulf %cst_45, %129 : f32
      %c0_46 = arith.constant 0 : index
      %c0_47 = arith.constant 0 : index
      %131 = vector.load %arg8[%c0_46, %c0_47] : memref<2x128xf32, #tpu.memory_space<vmem>>, vector<2x128xf32>
      %132 = vector.shape_cast %131 : vector<2x128xf32> to vector<1x2x128xf32>
      %cst_48 = arith.constant dense<0.000000e+00> : vector<1xf32>
      %133 = vector.multi_reduction <add>, %132, %cst_48 [1, 2] : vector<1x2x128xf32> to vector<1xf32>
      %134 = vector.shape_cast %133 : vector<1xf32> to vector<1x1x1xf32>
      %135 = vector.extract %134[0, 0, 0] : f32 from vector<1x1x1xf32>
      %136 = arith.divf %135, %124 : f32
      %137 = arith.addf %130, %136 : f32
      %c0_49 = arith.constant 0 : index
      %138 = memref.load %arg5[%c0_49] : memref<1xf32, #tpu.memory_space<smem>>
      memref.store %137, %arg5[%c0_49] : memref<1xf32, #tpu.memory_space<smem>>
    } else {
    }
    return
  }
  func.func @transform_0(%arg0: i32) -> (i32, i32, i32) {
    %c0_i32 = arith.constant 0 : i32
    %c0_i32_0 = arith.constant 0 : i32
    %c0_i32_1 = arith.constant 0 : i32
    return %c0_i32, %c0_i32_0, %arg0 : i32, i32, i32
  }
  func.func @transform_1(%arg0: i32) -> (i32, i32) {
    %c0_i32 = arith.constant 0 : i32
    %c0_i32_0 = arith.constant 0 : i32
    return %c0_i32, %arg0 : i32, i32
  }
  func.func @transform_2(%arg0: i32) -> (i32, i32, i32) {
    %c0_i32 = arith.constant 0 : i32
    %c0_i32_0 = arith.constant 0 : i32
    %c0_i32_1 = arith.constant 0 : i32
    return %c0_i32, %c0_i32_0, %arg0 : i32, i32, i32
  }
  func.func @transform_3(%arg0: i32) -> (i32, i32, i32) {
    %c0_i32 = arith.constant 0 : i32
    %c0_i32_0 = arith.constant 0 : i32
    %c0_i32_1 = arith.constant 0 : i32
    return %c0_i32, %c0_i32_0, %arg0 : i32, i32, i32
  }
  func.func @transform_4(%arg0: i32) -> i32 {
    %c0_i32 = arith.constant 0 : i32
    %c0_i32_0 = arith.constant 0 : i32
    return %c0_i32 : i32
  }
}

</mosaic_0001>

<llo_original>
// kernel: tpu_custom_call.1
$region0: #{tpu_custom_call.1}
  #allocation0 [shape = 'u32[]', space=smem, size = 0x4, offset = 0x4, fixed_abs, tag = 'smem constant byte address 0x4 - core index']
  #allocation1 [shape = 'u32[72,128]{1,0:T(1,128)}', space=vmem, size = 0x9000, scoped, tag = 'internal scratch']
  #allocation2 [shape = 'f32[2,128]{1,0:T(2,128)}', space=vmem, size = 0x400, scoped, tag = 'scratch operand']
  #allocation3 [shape = 'f32[2,128]{1,0:T(2,128)}', space=vmem, size = 0x400, scoped, tag = 'scratch operand']
  #allocation4 [shape = 'f32[2,128]{1,0:T(2,128)}', space=vmem, size = 0x400, scoped, tag = 'scratch operand']
  %s0 = inlined_call_operand.hbm [shape: f32[2,2,128], index: 0, kind: input, shape index: {}]
  %s1 = inlined_call_operand.hbm [shape: f32[2,128], index: 1, kind: input, shape index: {}]
  %s2 = inlined_call_operand.hbm [shape: f32[2,4,128], index: 2, kind: input, shape index: {}]
  %s3 = inlined_call_operand.hbm [shape: f32[2,4,128], index: 3, kind: input, shape index: {}]
  %s4 = inlined_call_operand.hbm [shape: f32[1], index: 4, kind: output, shape index: {}]
  %s5 = sld [smem:[#allocation0]]
  $region50: #{tpu_custom_call.1} parent=0
    _
  %s7 = ssub.s32 1, %s5
  %s8 = scalar_select 0, %s7, %s5
  $region1: #{tpu_custom_call.1} parent=0
    #allocation5 [shape = 'u8[2048]{0}', space=vmem, size = 0x800, scoped, tag = 'input window, operand 0, single buffered']
    #allocation6 [shape = 's32[1]{0}', space=sflag, size = 0x4, scoped, tag = 'scoped memory for tpu_custom_call.1']
    #allocation7 [shape = 's32[1]{0}', space=sflag, size = 0x4, scoped, tag = 'scoped memory for tpu_custom_call.1']
    #allocation8 [shape = 'u8[1024]{0}', space=vmem, size = 0x400, scoped, tag = 'input window, operand 1, single buffered']
    #allocation9 [shape = 's32[1]{0}', space=sflag, size = 0x4, scoped, tag = 'scoped memory for tpu_custom_call.1']
    #allocation10 [shape = 'u8[4096]{0}', space=vmem, size = 0x1000, scoped, tag = 'input window, operand 2, single buffered']
    #allocation11 [shape = 'u8[4096]{0}', space=vmem, size = 0x1000, scoped, tag = 'input window, operand 3, single buffered']
    #allocation12 [shape = 's32[1]{0}', space=sflag, size = 0x4, scoped, tag = 'scoped memory for tpu_custom_call.1']
    #allocation13 [shape = 'u8[512]{0}', space=smem, size = 0x200, scoped, tag = 'output window, operand 0, single buffered']
    %9 = vsyncpa [#allocation6], 0
    %10 = vsyncpa [#allocation9], 0
    %11 = vsyncpa [#allocation12], 0
    %12 = vsyncpa [#allocation7], 0
    // Predicated region
    $region2: #{tpu_custom_call.1} parent=1 // pred_check
      _
    $region3: #{tpu_custom_call.1} parent=1 // pred_check_branch
      %14 = sbr.rel (0) target = $region5
    $region4: #{tpu_custom_call.1} parent=1 // pred_region
      %16 = vsyncadd [#allocation6], 0
      %s17 = sshll.u32 %s0, 4
      %s18 = int_to_ptr.hbm [resolvable:$true] %s17
      %s19 = sshll.u32 [#allocation5], 4
      %s20 = int_to_ptr.vmem [resolvable:$true] %s19
      %25 = dma.hbm_to_vmem [thread:$0]  %s18, 64, %s20, [#allocation6], 32, 32, 2
    $region5: #{tpu_custom_call.1} parent=1 // pred_fallthru
      _
    // Predicated region
    $region6: #{tpu_custom_call.1} parent=1 // pred_check
      _
    $region7: #{tpu_custom_call.1} parent=1 // pred_check_branch
      %27 = sbr.rel (0) target = $region9
    $region8: #{tpu_custom_call.1} parent=1 // pred_region
      %29 = vsyncadd [#allocation9], 0
      %s31 = sshll.u32 %s1, 4
      %s32 = int_to_ptr.hbm [resolvable:$true] %s31
      %s33 = sshll.u32 [#allocation8], 4
      %s34 = int_to_ptr.vmem [resolvable:$true] %s33
      %36 = dma.hbm_to_vmem [thread:$0]  %s32, 32, %s34, [#allocation9]
    $region9: #{tpu_custom_call.1} parent=1 // pred_fallthru
      _
    // Predicated region
    $region10: #{tpu_custom_call.1} parent=1 // pred_check
      _
    $region11: #{tpu_custom_call.1} parent=1 // pred_check_branch
      %38 = sbr.rel (0) target = $region13
    $region12: #{tpu_custom_call.1} parent=1 // pred_region
      %40 = vsyncadd [#allocation9], 0
      %s41 = sshll.u32 %s2, 4
      %s42 = int_to_ptr.hbm [resolvable:$true] %s41
      %s43 = sshll.u32 [#allocation10], 4
      %s44 = int_to_ptr.vmem [resolvable:$true] %s43
      %49 = dma.hbm_to_vmem [thread:$0]  %s42, 128, %s44, [#allocation9], 64, 64, 4
    $region13: #{tpu_custom_call.1} parent=1 // pred_fallthru
      _
    // Predicated region
    $region14: #{tpu_custom_call.1} parent=1 // pred_check
      _
    $region15: #{tpu_custom_call.1} parent=1 // pred_check_branch
      %51 = sbr.rel (0) target = $region17
    $region16: #{tpu_custom_call.1} parent=1 // pred_region
      %53 = vsyncadd [#allocation12], 0
      %s54 = sshll.u32 %s3, 4
      %s55 = int_to_ptr.hbm [resolvable:$true] %s54
      %s56 = sshll.u32 [#allocation11], 4
      %s57 = int_to_ptr.vmem [resolvable:$true] %s56
      %62 = dma.hbm_to_vmem [thread:$0]  %s55, 128, %s57, [#allocation12], 64, 64, 4
    $region17: #{tpu_custom_call.1} parent=1 // pred_fallthru
      _
    // Predicated region
    $region18: #{tpu_custom_call.1} parent=1 // pred_check
      _
    $region19: #{tpu_custom_call.1} parent=1 // pred_check_branch
      %64 = sbr.rel (0) target = $region21
    $region20: #{tpu_custom_call.1} parent=1 // pred_region
      %66 = dma.done [#allocation6], 64
    $region21: #{tpu_custom_call.1} parent=1 // pred_fallthru
      _
    // Predicated region
    $region22: #{tpu_custom_call.1} parent=1 // pred_check
      _
    $region23: #{tpu_custom_call.1} parent=1 // pred_check_branch
      %68 = sbr.rel (0) target = $region25
    $region24: #{tpu_custom_call.1} parent=1 // pred_region
      %70 = dma.done [#allocation9], 32
    $region25: #{tpu_custom_call.1} parent=1 // pred_fallthru
      _
    // Predicated region
    $region26: #{tpu_custom_call.1} parent=1 // pred_check
      _
    $region27: #{tpu_custom_call.1} parent=1 // pred_check_branch
      %72 = sbr.rel (0) target = $region29
    $region28: #{tpu_custom_call.1} parent=1 // pred_region
      %74 = dma.done [#allocation9], 128
    $region29: #{tpu_custom_call.1} parent=1 // pred_fallthru
      _
    // Predicated region
    $region30: #{tpu_custom_call.1} parent=1 // pred_check
      _
    $region31: #{tpu_custom_call.1} parent=1 // pred_check_branch
      %76 = sbr.rel (0) target = $region33
    $region32: #{tpu_custom_call.1} parent=1 // pred_region
      %78 = dma.done [#allocation12], 128
    $region33: #{tpu_custom_call.1} parent=1 // pred_fallthru
      _
    %p79 = scmp.eq.s32.totalorder 0, 0
    // Predicated region
    $region34: #{tpu_custom_call.1} parent=1 // pred_check
      %p80 = pneg %p79
    $region35: #{tpu_custom_call.1} parent=1 // pred_check_branch
      %82 = sbr.rel (%p80) target = $region37
    $region36: #{tpu_custom_call.1} parent=1 // pred_region
      %83 = vst [vmem:[#allocation2] sm:$0x3] 0.0
      %84 = vst [vmem:[#allocation3] sm:$0x3] 0.0
      %85 = vst [vmem:[#allocation4] sm:$0x3] 0.0
    $region37: #{tpu_custom_call.1} parent=1 // pred_fallthru
      _
    %v86 = vld [vmem:[#allocation5] sm:$0x3]
    %v87 = vld [vmem:[#allocation5 + $0x2] sm:$0x3]
    %v88 = vld [vmem:[#allocation8] sm:$0x3]
    %v89 = vld [vmem:[#allocation10] sm:$0xf]
    %v90 = vld [vmem:[#allocation10 + $0x4] sm:$0xf]
    %v91 = vld [vmem:[#allocation11] sm:$0xf]
    %v92 = vld [vmem:[#allocation11 + $0x4] sm:$0xf]
    %v95 = vrot.slane %v86, 7
    %v96 = vrot.slane %v87, 7
    %v99 = vsub.f32 %v86, %v95
    %v100 = vsub.f32 %v87, %v96
    %v101 = vmax.f32 %v99, 0.0
    %v102 = vmax.f32 %v100, 0.0
    %v103 = vand.u32 2147483647, %v99
    %v104 = vand.u32 2147483647, %v100
    %v105 = vsub.f32 0.0, %v103
    %v106 = vsub.f32 0.0, %v104
    %v107 = vmul.f32 %v105, 1.442695
    %v108 = vpow.pop %v107
    %v109 = vmul.f32 %v106, 1.442695
    %v110 = vpow.pop %v109
    %v111 = vadd.f32 %v108, 1.0
    %v112 = vadd.f32 %v110, 1.0
    %v113 = vlog2.pop %v111
    %v114 = vmul.f32 %v113, 0.6931472
    %v115 = vlog2.pop %v112
    %v116 = vmul.f32 %v115, 0.6931472
    %v117 = vadd.f32 %v101, %v114
    %v118 = vadd.f32 %v102, %v116
    %v121 = vrot.slane %v99, 1
    %vm122 = vcmask 1041409
    %v123 = vsel %vm122, %v100, %v121
    %v125 = vmul.f32 %v88, %v123
    %v127 = vrot.slane %v125, 7
    %v130 = vsub.f32 %v117, %v127
    %v131 = vsub.f32 %v118, %v125
    %v132 = vsub.f32 %v89, %v91
    %v133 = vsub.f32 %v90, %v92
    %v134 = vand.u32 2147483647, %v132
    %v135 = vand.u32 2147483647, %v133
    %v138 = vrot.slane %v134, 1
    %v139 = vrot.slane %v135, 1
    %v142 = vadd.f32 %v134, %v138
    %v143 = vadd.f32 %v135, %v139
    %v144 = vrot.slane %v134, 2
    %v145 = vrot.slane %v135, 2
    %v148 = vadd.f32 %v142, %v144
    %v149 = vadd.f32 %v143, %v145
    %v150 = vrot.slane %v134, 3
    %v151 = vrot.slane %v135, 3
    %v154 = vadd.f32 %v148, %v150
    %v155 = vadd.f32 %v149, %v151
    %v156 = vmul.f32 %v89, 0.5
    %v157 = vmul.f32 %v90, 0.5
    %v158 = vmul.f32 %v91, 0.5
    %v159 = vmul.f32 %v92, 0.5
    %v162 = vrot.slane %v156, 2
    %v163 = vrot.slane %v157, 2
    %v166 = vsub.f32 %v89, %v162
    %v167 = vsub.f32 %v90, %v163
    %v168 = vadd.f32 %v89, %v162
    %v169 = vadd.f32 %v90, %v163
    %v172 = vrot.slane %v158, 2
    %v173 = vrot.slane %v159, 2
    %v176 = vsub.f32 %v91, %v172
    %v177 = vsub.f32 %v92, %v173
    %v178 = vadd.f32 %v91, %v172
    %v179 = vadd.f32 %v92, %v173
    %v180 = vmin.f32 %v168, %v178
    %v181 = vmin.f32 %v169, %v179
    %v182 = vmax.f32 %v166, %v176
    %v183 = vmax.f32 %v167, %v177
    %v184 = vsub.f32 %v180, %v182
    %v185 = vsub.f32 %v181, %v183
    %v186 = vmax.f32 %v184, 0.0
    %v187 = vmax.f32 %v185, 0.0
    %v190 = vrot.slane %v186, 1
    %v191 = vrot.slane %v187, 1
    %v194 = vmul.f32 %v186, %v190
    %v195 = vmul.f32 %v187, %v191
    %v198 = vrot.slane %v89, 1
    %v199 = vrot.slane %v90, 1
    %v202 = vmul.f32 %v89, %v198
    %v203 = vmul.f32 %v90, %v199
    %v206 = vrot.slane %v91, 1
    %v207 = vrot.slane %v92, 1
    %v210 = vmul.f32 %v91, %v206
    %v211 = vmul.f32 %v92, %v207
    %v212 = vadd.f32 %v202, %v210
    %v213 = vadd.f32 %v203, %v211
    %v216 = vrot.slane %v194, 6
    %v217 = vrot.slane %v195, 6
    %v220 = vsub.f32 %v212, %v216
    %v221 = vsub.f32 %v213, %v217
    %v222 = vadd.f32 %v220, 1e-07
    %v223 = vadd.f32 %v221, 1e-07
    %v224 = vrcp.pop %v222
    %v225 = vrcp.pop %v223
    %v228 = vrot.slane %v224, 2
    %v229 = vrot.slane %v225, 2
    %v232 = vmul.f32 %v194, %v228
    %v233 = vmul.f32 %v195, %v229
    %v234 = vmax.f32 %v168, %v178
    %v235 = vmax.f32 %v169, %v179
    %v236 = vmin.f32 %v166, %v176
    %v237 = vmin.f32 %v167, %v177
    %v238 = vsub.f32 %v234, %v236
    %v239 = vsub.f32 %v235, %v237
    %v242 = vrot.slane %v238, 1
    %v243 = vrot.slane %v239, 1
    %v246 = vmul.f32 %v238, %v242
    %v247 = vmul.f32 %v239, %v243
    %v250 = vrot.slane %v220, 2
    %v251 = vrot.slane %v221, 2
    %v254 = vsub.f32 %v246, %v250
    %v255 = vsub.f32 %v247, %v251
    %v256 = vadd.f32 %v246, 1e-07
    %v257 = vadd.f32 %v247, 1e-07
    %v258 = vrcp.pop %v256
    %v259 = vrcp.pop %v257
    %v260 = vmul.f32 %v254, %v258
    %v261 = vmul.f32 %v255, %v259
    %v262 = vsub.f32 %v232, %v260
    %v263 = vsub.f32 %v233, %v261
    %v264 = vmul.f32 %v154, 5.0
    %v265 = vmul.f32 %v155, 5.0
    %v266 = vsub.f32 1.0, %v262
    %v267 = vsub.f32 1.0, %v263
    %v268 = vmul.f32 %v266, 2.0
    %v269 = vmul.f32 %v267, 2.0
    %v270 = vadd.f32 %v264, %v268
    %v271 = vadd.f32 %v265, %v269
    %v274 = vrot.slane %v271, 7
    %v275 = vsel %vm122, %v274, %v270
    %v277 = vmul.f32 %v88, %v275
    %v278 = vld [vmem:[#allocation2] sm:$0x3]
    %v281 = vrot.slane %v130, 1
    %v282 = vsel %vm122, %v131, %v281
    %v284 = vadd.f32 %v278, %v282
    %285 = vst [vmem:[#allocation2] sm:$0x3] %v284
    %v286 = vld [vmem:[#allocation3] sm:$0x3]
    %v287 = vadd.f32 %v286, %v88
    %288 = vst [vmem:[#allocation3] sm:$0x3] %v287
    %v289 = vld [vmem:[#allocation4] sm:$0x3]
    %v290 = vadd.f32 %v289, %v277
    %291 = vst [vmem:[#allocation4] sm:$0x3] %v290
    // Predicated region
    $region38: #{tpu_custom_call.1} parent=1 // pred_check
      %p292 = pneg %p79
    $region39: #{tpu_custom_call.1} parent=1 // pred_check_branch
      %294 = sbr.rel (%p292) target = $region41
    $region40: #{tpu_custom_call.1} parent=1 // pred_region
      %v295 = vld [vmem:[#allocation3] sm:$0x3]
      %vm296 = vcmask 1041408
      %v297 = vsel %vm296, %v295, 0.0
      %298 = vadd.xlane.f32.xlu0 %v297
      %v299 = vpop.xlane.xlu0 %298
      %v300 = vrot.slane %v299, 4
      %v301 = vadd.f32 %v299, %v300
      %v302 = vrot.slane %v301, 2
      %v303 = vadd.f32 %v301, %v302
      %v304 = vrot.slane %v303, 1
      %v305 = vadd.f32 %v303, %v304
      %s306 = vtos %v305
      %s307 = smax.f32 %s306, 1.0
      %v308 = vld [vmem:[#allocation2] sm:$0x3]
      %v309 = vsel %vm296, %v308, 0.0
      %310 = vadd.xlane.f32.xlu0 %v309
      %v311 = vpop.xlane.xlu0 %310
      %v312 = vrot.slane %v311, 4
      %v313 = vadd.f32 %v311, %v312
      %v314 = vrot.slane %v313, 2
      %v315 = vadd.f32 %v313, %v314
      %v316 = vrot.slane %v315, 1
      %v317 = vadd.f32 %v315, %v316
      %s318 = vtos %v317
      %s319 = smul.f32 %s318, 0.032554686
      %v320 = vld [vmem:[#allocation4] sm:$0x3]
      %v321 = vsel %vm296, %v320, 0.0
      %322 = vadd.xlane.f32.xlu0 %v321
      %v323 = vpop.xlane.xlu0 %322
      %v324 = vrot.slane %v323, 4
      %v325 = vadd.f32 %v323, %v324
      %v326 = vrot.slane %v325, 2
      %v327 = vadd.f32 %v325, %v326
      %v328 = vrot.slane %v327, 1
      %v329 = vadd.f32 %v327, %v328
      %s330 = vtos %v329
      %v331 = vstv %s307
      %v332 = vrcp.pop %v331
      %v333 = vmul.f32 %v331, %v332
      %v334 = vsub.f32 1.0, %v333
      %v335 = vmul.f32 %v332, %v334
      %v336 = vadd.f32 %v332, %v335
      %vm337 = vweird.f32 %v331
      %vm338 = vweird.f32 %v332
      %vm339 = vmor %vm337, %vm338
      %v340 = vsel %vm339, %v332, %v336
      %v341 = vand.u32 2147483647, %v331
      %vm342 = vcmp.eq.f32.partialorder %v341, 8.507059e+37
      %v343 = vand.u32 %v331, 2147483648
      %v344 = vor.u32 1.1754944e-38, %v343
      %v345 = vsel %vm342, %v344, %v340
      %s346 = vtos %v345
      %s347 = smul.f32 %s330, %s346
      %s348 = sadd.f32 %s319, %s347
      %s349 = scalar_lea.smem [#allocation13], 0
      %350 = sst [smem:[%s349]] %s348
    $region41: #{tpu_custom_call.1} parent=1 // pred_fallthru
      _
    // Predicated region
    $region42: #{tpu_custom_call.1} parent=1 // pred_check
      _
    $region43: #{tpu_custom_call.1} parent=1 // pred_check_branch
      %352 = sbr.rel (0) target = $region45
    $region44: #{tpu_custom_call.1} parent=1 // pred_region
      %354 = vsyncadd [#allocation7], 0
      %s356 = sshll.u32 %s4, 4
      %s357 = int_to_ptr.hbm [resolvable:$true] %s356
      %359 = dma.smem_to_hbm [#allocation13], 16, %s357, [#allocation7]
    $region45: #{tpu_custom_call.1} parent=1 // pred_fallthru
      _
    // Predicated region
    $region46: #{tpu_custom_call.1} parent=1 // pred_check
      _
    $region47: #{tpu_custom_call.1} parent=1 // pred_check_branch
      %361 = sbr.rel (0) target = $region49
    $region48: #{tpu_custom_call.1} parent=1 // pred_region
      %363 = dma.done [#allocation7], 16
    $region49: #{tpu_custom_call.1} parent=1 // pred_fallthru
      _
    %364 = sfence
    %365 = vsyncpa [#allocation6], 1
    %366 = vsyncpa [#allocation9], 1
    %367 = vsyncpa [#allocation12], 1
    %368 = vsyncpa [#allocation7], 1

</llo_original>
